<compile_context>
chip_gen: v6e
topology: v6e:2x2x1
jax: 0.10.0
libtpu: 0.0.40
codegen_flags: <defaults>
</compile_context>

<pallas_src>
import jax
import jax.numpy as jnp
from jax.experimental import pallas as pl
from jax.experimental.pallas import tpu as pltpu


def _copy_kernel(x_ref, o_ref):
    # Pure pass-through: forward(x) = x
    o_ref[...] = x_ref[...]


_LANE = 128
_MAX_LANE_WIDTH = 4096                   # up to 32 * 128 lanes per row
_TILE_BYTES_TARGET = 8 * 1024 * 1024     # per buffer; 4x tile ~ 32 MiB pipelined


def _sublane_quantum(dtype) -> int:
    """Min sublane multiple for a full (unmasked) tile: (8,128) f32,
    (16,128) bf16/f16, (32,128) int8/fp8."""
    itemsize = jnp.dtype(dtype).itemsize
    return max(8, 32 // max(1, itemsize))


def _choose_layout(total: int, dtype):
    """Pick (rows, lane_width, tile_rows) for a pad-free flat copy, or None."""
    q = _sublane_quantum(dtype)
    itemsize = jnp.dtype(dtype).itemsize
    # Largest power-of-two lane width (>=128) such that the flat array splits
    # exactly into (q, n) tiles — no padding, no trailing slice.
    n = None
    w = _MAX_LANE_WIDTH
    while w >= _LANE:
        if total % (w * q) == 0:
            n = w
            break
        w //= 2
    if n is None:
        return None
    m = total // n
    # Rows per tile: biggest tile <= target bytes, multiple of q.
    tile_m = max(q, min(m, _TILE_BYTES_TARGET // (n * itemsize)))
    tile_m = max(q, (tile_m // q) * q)
    # Prefer >=2 grid steps when possible (v7x: 2 TCs share the HBM stream).
    if pl.cdiv(m, tile_m) < 2 and m > q:
        tile_m = max(q, ((pl.cdiv(m, 2) + q - 1) // q) * q)
    return m, n, tile_m


def identity(x):
    """Identity forward pass: forward(x) = x (no pallas_call, no HBM traffic)."""
    return x


def identity_copy(x):
    """Materialized identity copy via a lane-dense, pad-free Pallas copy kernel."""
    orig_shape = x.shape
    flat = x.reshape(-1)
    total = flat.shape[0]

    layout = _choose_layout(total, flat.dtype)
    if layout is None:
        # Flat size doesn't split into full (q, 128) tiles: copy the whole
        # array as a single block (legal because block_shape == full dims).
        # TODO(synk): stream a tiled main body + small remainder for huge,
        # oddly-sized arrays instead of one monolithic block.
        return pl.pallas_call(
            _copy_kernel,
            out_shape=jax.ShapeDtypeStruct(x.shape, x.dtype),
        )(x)

    m, n, tile_m = layout
    x2 = flat.reshape(m, n)                       # metadata-only reshape
    tile_bytes = tile_m * n * flat.dtype.itemsize
    # in + out, each double-buffered => ~4x tile, plus headroom; stays under
    # v7x's 64 MiB physical VMEM and v5e/v6e's 128 MiB.
    vmem_limit = min(48 * 1024 * 1024, 4 * tile_bytes + 4 * 1024 * 1024)

    out = pl.pallas_call(
        _copy_kernel,
        out_shape=jax.ShapeDtypeStruct((m, n), x2.dtype),
        grid_spec=pltpu.PrefetchScalarGridSpec(
            num_scalar_prefetch=0,
            grid=(pl.cdiv(m, tile_m),),           # ragged last block allowed
            in_specs=[pl.BlockSpec((tile_m, n), lambda i: (i, 0))],
            out_specs=pl.BlockSpec((tile_m, n), lambda i: (i, 0)),
        ),
        compiler_params=pltpu.CompilerParams(
            dimension_semantics=("parallel",),
            vmem_limit_bytes=vmem_limit,
        ),
    )(x2)
    return out.reshape(orig_shape)                # metadata-only reshape


if __name__ == "__main__":
    key = jax.random.PRNGKey(0)
    # Small NCHW-shaped input consistent with typical conv-style modules.
    x = jax.random.normal(key, (2, 4, 16, 16), dtype=jnp.float32)

    # Primary path: true no-op (highest-value optimization).
    y = identity(x)
    jax.block_until_ready(y)
    assert y.shape == x.shape and y.dtype == x.dtype
    assert bool(jnp.all(y == x))

    # Pallas copy-kernel path (run once so the kernel compiles & executes).
    y2 = identity_copy(x)
    jax.block_until_ready(y2)
    assert y2.shape == x.shape and y2.dtype == x.dtype
    assert bool(jnp.all(y2 == x))

    # Packed-dtype path (exercises the dtype-aware sublane quantum, bf16 -> 16).
    xb = x.astype(jnp.bfloat16)
    y3 = identity_copy(xb)
    jax.block_until_ready(y3)
    assert y3.shape == xb.shape and y3.dtype == xb.dtype
    assert bool(jnp.all(y3 == xb))

    print("KERNEL_OK")
</pallas_src>

<mosaic_0001>
module attributes {stable_mosaic.version = 11 : i64} {
  func.func @_copy_kernel(%arg0: i32, %arg1: memref<8x256xf32, #tpu.memory_space<vmem>>, %arg2: memref<8x256xf32, #tpu.memory_space<vmem>>) attributes {dimension_semantics = [#tpu.dimension_semantics<parallel>], iteration_bounds = array<i64: 1>, scalar_prefetch = 0 : i64, scratch_operands = 0 : i64, tpu.core_type = #tpu.core_type<tc>, window_params = [{transform_indices = @transform_0, window_bounds = array<i64: 8, 256>}, {transform_indices = @transform_1, window_bounds = array<i64: 8, 256>}]} {
    %c0 = arith.constant 0 : index
    %c0_0 = arith.constant 0 : index
    %0 = vector.load %arg1[%c0, %c0_0] : memref<8x256xf32, #tpu.memory_space<vmem>>, vector<8x256xf32>
    %c0_1 = arith.constant 0 : index
    %c0_2 = arith.constant 0 : index
    %1 = vector.load %arg2[%c0_1, %c0_2] : memref<8x256xf32, #tpu.memory_space<vmem>>, vector<8x256xf32>
    tpu.vector_store %arg2[%c0_1, %c0_2], %0 {strides = array<i32>} : memref<8x256xf32, #tpu.memory_space<vmem>>, vector<8x256xf32>,
    return
  }
  func.func @transform_0(%arg0: i32) -> (i32, i32) {
    %c0_i32 = arith.constant 0 : i32
    %c0_i32_0 = arith.constant 0 : i32
    return %arg0, %c0_i32 : i32, i32
  }
  func.func @transform_1(%arg0: i32) -> (i32, i32) {
    %c0_i32 = arith.constant 0 : i32
    %c0_i32_0 = arith.constant 0 : i32
    return %arg0, %c0_i32 : i32, i32
  }
}

</mosaic_0001>

<llo_original>
// kernel: tpu_custom_call.1
$region0: #{tpu_custom_call.1}
  #allocation0 [shape = 'u32[]', space=smem, size = 0x4, offset = 0x4, fixed_abs, tag = 'smem constant byte address 0x4 - core index']
  #allocation1 [shape = 'u32[144,128]{1,0:T(1,128)}', space=vmem, size = 0x12000, scoped, tag = 'internal scratch']
  %s0 = inlined_call_operand.hbm [shape: f32[8,256], index: 0, kind: input, shape index: {}]
  %s1 = inlined_call_operand.hbm [shape: f32[8,256], index: 1, kind: output, shape index: {}]
  %s2 = sld [smem:[#allocation0]]
  $region18: #{tpu_custom_call.1} parent=0
    _
  %s4 = ssub.s32 1, %s2
  %s5 = scalar_select 0, %s4, %s2
  $region1: #{tpu_custom_call.1} parent=0
    #allocation2 [shape = 'u8[8192]{0}', space=vmem, size = 0x2000, scoped, tag = 'input window, operand 0, single buffered']
    #allocation3 [shape = 's32[1]{0}', space=sflag, size = 0x4, scoped, tag = 'scoped memory for tpu_custom_call.1']
    #allocation4 [shape = 's32[1]{0}', space=sflag, size = 0x4, scoped, tag = 'scoped memory for tpu_custom_call.1']
    #allocation5 [shape = 'u8[8192]{0}', space=vmem, size = 0x2000, scoped, tag = 'output window, operand 0, single buffered']
    %6 = vsyncpa [#allocation3], 0
    %7 = vsyncpa [#allocation4], 0
    // Predicated region
    $region2: #{tpu_custom_call.1} parent=1 // pred_check
      _
    $region3: #{tpu_custom_call.1} parent=1 // pred_check_branch
      %9 = sbr.rel (0) target = $region5
    $region4: #{tpu_custom_call.1} parent=1 // pred_region
      %s11 = ssub.s32 256, 256
      %12 = vsyncadd [#allocation3], %s11
      %s14 = sshll.u32 [#allocation2], 4
      %s15 = int_to_ptr.vmem [resolvable:$true] %s14
      %17 = dma.hbm_to_vmem [thread:$0]  %s0, 256, %s15, [#allocation3]
    $region5: #{tpu_custom_call.1} parent=1 // pred_fallthru
      _
    // Predicated region
    $region6: #{tpu_custom_call.1} parent=1 // pred_check
      _
    $region7: #{tpu_custom_call.1} parent=1 // pred_check_branch
      %19 = sbr.rel (0) target = $region9
    $region8: #{tpu_custom_call.1} parent=1 // pred_region
      %20 = dma.done [#allocation3], 256
    $region9: #{tpu_custom_call.1} parent=1 // pred_fallthru
      _
    %v21 = vld [vmem:[#allocation2] sm:$0xff]
    %v22 = vld [vmem:[#allocation2 + $0x8] sm:$0xff]
    %23 = vst [vmem:[#allocation5] sm:$0xff] %v21
    %24 = vst [vmem:[#allocation5 + $0x8] sm:$0xff] %v22
    // Predicated region
    $region10: #{tpu_custom_call.1} parent=1 // pred_check
      _
    $region11: #{tpu_custom_call.1} parent=1 // pred_check_branch
      %26 = sbr.rel (0) target = $region13
    $region12: #{tpu_custom_call.1} parent=1 // pred_region
      %s28 = ssub.s32 256, 256
      %29 = vsyncadd [#allocation4], %s28
      %s31 = sshll.u32 [#allocation5], 4
      %s32 = int_to_ptr.vmem [resolvable:$true] %s31
      %34 = dma.vmem_to_hbm [thread:$0]  %s32, 256, %s1, [#allocation4]
    $region13: #{tpu_custom_call.1} parent=1 // pred_fallthru
      _
    // Predicated region
    $region14: #{tpu_custom_call.1} parent=1 // pred_check
      _
    $region15: #{tpu_custom_call.1} parent=1 // pred_check_branch
      %36 = sbr.rel (0) target = $region17
    $region16: #{tpu_custom_call.1} parent=1 // pred_region
      %37 = dma.done [#allocation4], 256
    $region17: #{tpu_custom_call.1} parent=1 // pred_fallthru
      _
    %38 = vsyncpa [#allocation3], 1
    %39 = vsyncpa [#allocation4], 1

</llo_original>
